<compile_context>
chip_gen: v7x
topology: tpu7x:2x2x1
jax: 0.10.0
libtpu: 0.0.40
codegen_flags: <defaults>
</compile_context>

<pallas_src>
import functools

import jax
import jax.numpy as jnp
from jax import lax
from jax.experimental import pallas as pl
from jax.experimental.pallas import tpu as pltpu


def _basic_block_kernel(x_ref, w1_ref, b1_ref, w2_ref, b2_ref,
                        lmask_ref, rmask_ref, out_ref, slab_ref,
                        *, TH, W, n_t, NR):
    """One (batch, row-tile) grid step.

    x_ref    : (1, Cp, FR, 128)  zero-padded input (4 rows top/bottom, channels
                                 -> Cp), pixels flattened then folded into
                                 128-lane rows; resident per batch element.
    w1_ref   : (Cp, 9*Cp)        conv1 weights * BN1 scale, cols = (kh, kw, cin)
    b1_ref   : (Cp, 1)           BN1 bias
    w2_ref   : (Cp, 9*Cp)        conv2 weights * BN2 scale
    b2_ref   : (Cp, 1)           BN2 bias
    lmask_ref: (1, Ls1)          1 except where span col % W == 0
    rmask_ref: (1, Ls1)          1 except where span col % W == W-1
    out_ref  : (1, Cout, TH*W)   lane-dense output tile
    slab_ref : (9*Cp, L1)        VMEM im2col slab scratch (re-used by conv2)
    """
    cp = w1_ref.shape[0]
    cout = out_ref.shape[1]
    L1 = (TH + 4) * W            # conv1 rows computed per tile (2-row halo each side)
    L2 = TH * W                  # block output pixels
    Ls1 = L1 + 2 * W             # shifted-span length for conv1
    Ls2 = L2 + 2 * W             # shifted-span length for conv2
    rpt = (TH * W) // 128        # folded 128-lane rows per tile

    t = pl.program_id(1)

    # ---- halo window: aligned dynamic slice on the folded-row axis; the
    # flatten below keeps the minor dim at exactly 128 so it is layout-free.
    if n_t == 1:
        fr0 = 0
    else:
        fr0 = pl.multiple_of(t * rpt, rpt & -rpt)
    xwin = x_ref[0, :, pl.ds(fr0, NR), :].reshape(cp, NR * 128)

    lmask = lmask_ref[...]                        # (1, Ls1)
    rmask = rmask_ref[...]

    # ---- hoisted +/-1 column shifts: one slice + one mask per direction ----
    xm = xwin[:, W - 1:W - 1 + Ls1] * lmask       # tap one pixel to the left
    xc = xwin[:, W:W + Ls1]                       # centre tap
    xp = xwin[:, W + 1:W + 1 + Ls1] * rmask       # tap one pixel to the right

    # ---- conv1 im2col slab, written piecewise into VMEM scratch ----
    srcs = (xm, xc, xp)
    for kh in range(3):
        for kw in range(3):
            slab_ref[pl.ds((kh * 3 + kw) * cp, cp), :] = \
                srcs[kw][:, kh * W:kh * W + L1]

    # ---- conv1 (BN1 scale pre-folded): one MXU matmul ----
    acc1 = jnp.dot(w1_ref[...], slab_ref[...], preferred_element_type=jnp.float32)
    y1 = jnp.maximum(acc1 + b1_ref[...], 0.0)     # (Cp, L1) f32

    # conv2 must see zero padding at the image top/bottom: zero the conv1 rows
    # that fall outside the image.  Only the first / last row tile can trigger.
    lane = lax.broadcasted_iota(jnp.int32, (1, L1), 1)
    bad_top = jnp.logical_and(t == 0,
                              jnp.logical_and(lane >= W, lane < 2 * W))
    bad_bot = jnp.logical_and(t == n_t - 1,
                              jnp.logical_and(lane >= (TH + 2) * W,
                                              lane < (TH + 3) * W))
    y1 = jnp.where(jnp.logical_or(bad_top, bad_bot), 0.0, y1)

    # early cast: build the conv2 slab in the matmul dtype (bf16 by default)
    y1 = y1.astype(slab_ref.dtype)

    ym = y1[:, W - 1:W - 1 + Ls2] * lmask[:, :Ls2]
    yc = y1[:, W:W + Ls2]
    yp = y1[:, W + 1:W + 1 + Ls2] * rmask[:, :Ls2]

    srcs2 = (ym, yc, yp)
    for kh in range(3):
        for kw in range(3):
            slab_ref[pl.ds((kh * 3 + kw) * cp, cp), :L2] = \
                srcs2[kw][:, kh * W:kh * W + L2]

    # ---- conv2 (BN2 scale pre-folded): one MXU matmul ----
    acc2 = jnp.dot(w2_ref[...], slab_ref[:, :L2], preferred_element_type=jnp.float32)

    # ---- BN2 bias + residual (rows of this tile sit at window offset 4*W) ----
    res = xwin[:, 4 * W:4 * W + L2].astype(jnp.float32)
    out = jnp.maximum(acc2 + b2_ref[...] + res, 0.0)
    out_ref[0] = out[:cout].astype(out_ref.dtype)


def basic_block_pallas(x_nchw, params, *, matmul_dtype=jnp.bfloat16):
    """x_nchw: (N, C, H, W) float32.  Returns (N, C, H, W) float32."""
    w1, g1, be1, m1, v1, w2, g2, be2, m2, v2 = params
    eps = 1e-5

    N, Cin, H, W = x_nchw.shape
    Cout = w1.shape[0]
    assert w1.shape == (Cout, Cin, 3, 3) and w2.shape == (Cout, Cout, 3, 3)
    assert Cout == Cin, "stride=1 / downsample=None BasicBlock needs planes == inplanes"

    mdt = jnp.dtype(matmul_dtype)

    # Fold eval-mode BN into per-out-channel scale (into the weights) + bias.
    s1 = g1 / jnp.sqrt(v1 + eps)
    b1 = be1 - m1 * s1
    s2 = g2 / jnp.sqrt(v2 + eps)
    b2 = be2 - m2 * s2
    w1f = w1 * s1[:, None, None, None]
    w2f = w2 * s2[:, None, None, None]

    # Channel padding to a full sublane pack for the matmul dtype (16 for bf16).
    mult = 8 * (4 // mdt.itemsize)
    Cp = max(mult, -(-Cin // mult) * mult)

    def pack_w(wf):  # (Cout, Cin, 3, 3) -> (Cp, 9*Cp), cols ordered (kh, kw, cin)
        wp = jnp.pad(wf, ((0, Cp - Cout), (0, Cp - Cin), (0, 0), (0, 0)))
        return jnp.transpose(wp, (0, 2, 3, 1)).reshape(Cp, 9 * Cp).astype(mdt)

    w1_mat = pack_w(w1f)
    w2_mat = pack_w(w2f)
    b1_c = jnp.pad(b1, (0, Cp - Cout)).reshape(Cp, 1).astype(jnp.float32)
    b2_c = jnp.pad(b2, (0, Cp - Cout)).reshape(Cp, 1).astype(jnp.float32)

    # ---- pick the LARGEST row tile that fits the VMEM budget (biggest first).
    # TH*W % 256 keeps the output lane-dense and the folded-row offsets aligned
    # for packed (bf16) sublanes.
    budget = 32 * 1024 * 1024
    TH = None
    for cand in (64, 32, 16, 8):
        if H % cand or (cand * W) % 256:
            continue
        L1c = (cand + 4) * W
        NRc = -(-((cand + 7) * W + 1) // 128)
        NRc += NRc % 2
        FLc = -(-max((H - cand) * W + NRc * 128, (H + 8) * W) // 256) * 256
        est = (2 * Cp * FLc * mdt.itemsize            # resident x, double-buffered
               + 4 * Cp * 9 * Cp * mdt.itemsize       # two weight mats, 2 buffers
               + 2 * Cout * cand * W * 4              # output block, 2 buffers
               + 9 * Cp * L1c * mdt.itemsize          # slab scratch
               + Cp * NRc * 128 * mdt.itemsize        # window value
               + 3 * Cp * (L1c + 2 * W) * mdt.itemsize  # xm/xc/xp spans
               + 3 * Cp * L1c * 4)                    # f32 acc / y1 headroom
        if est <= budget:
            TH = cand
            break
    if TH is None:
        TH = H  # correctness fallback; may hit masked partial stores
    n_t = H // TH

    L1 = (TH + 4) * W
    L2 = TH * W
    Ls1 = L1 + 2 * W
    NR = -(-((TH + 7) * W + 1) // 128)
    NR += NR % 2
    FL = -(-max((H - TH) * W + NR * 128, (H + 8) * W) // 256) * 256
    FR = FL // 128

    # x in HBM in the matmul dtype (halves DMA + resident VMEM for bf16),
    # padded 4 rows top/bottom and channels->Cp, pixels flattened, then folded
    # into 128-lane rows so the kernel's halo window is an aligned slice.
    x_pad = jnp.pad(x_nchw.astype(mdt), ((0, 0), (0, Cp - Cin), (4, 4), (0, 0)))
    x_flat = x_pad.reshape(N, Cp, (H + 8) * W)
    x_flat = jnp.pad(x_flat, ((0, 0), (0, 0), (0, FL - (H + 8) * W)))
    x_fold = x_flat.reshape(N, Cp, FR, 128)

    # Tiny periodic column masks (constant-index inputs, fetched once).
    s = jnp.arange(Ls1)
    lmask = (s % W != 0).astype(mdt).reshape(1, Ls1)
    rmask = (s % W != W - 1).astype(mdt).reshape(1, Ls1)

    grid_spec = pltpu.PrefetchScalarGridSpec(
        num_scalar_prefetch=0,
        grid=(N, n_t),
        in_specs=[
            pl.BlockSpec((1, Cp, FR, 128), lambda n, t: (n, 0, 0, 0)),  # x (resident per n)
            pl.BlockSpec((Cp, 9 * Cp), lambda n, t: (0, 0)),            # w1 * s1
            pl.BlockSpec((Cp, 1), lambda n, t: (0, 0)),                 # b1
            pl.BlockSpec((Cp, 9 * Cp), lambda n, t: (0, 0)),            # w2 * s2
            pl.BlockSpec((Cp, 1), lambda n, t: (0, 0)),                 # b2
            pl.BlockSpec((1, Ls1), lambda n, t: (0, 0)),                # left col mask
            pl.BlockSpec((1, Ls1), lambda n, t: (0, 0)),                # right col mask
        ],
        out_specs=pl.BlockSpec((1, Cout, L2), lambda n, t: (n, 0, t)),
        scratch_shapes=[pltpu.VMEM((9 * Cp, L1), mdt)],
    )

    out_flat = pl.pallas_call(
        functools.partial(_basic_block_kernel, TH=TH, W=W, n_t=n_t, NR=NR),
        out_shape=jax.ShapeDtypeStruct((N, Cout, H * W), jnp.float32),
        grid_spec=grid_spec,
        compiler_params=pltpu.CompilerParams(
            dimension_semantics=("parallel", "parallel"),
            vmem_limit_bytes=48 * 1024 * 1024),
    )(x_fold, w1_mat, b1_c, w2_mat, b2_c, lmask, rmask)

    # Free reshape (contiguous), no transpose: output is already NCHW.
    return out_flat.reshape(N, Cout, H, W)


def basic_block_reference(x_nchw, params):
    """Pure-JAX reference (eval-mode BN), NCHW like PyTorch."""
    w1, g1, be1, m1, v1, w2, g2, be2, m2, v2 = params
    eps = 1e-5
    dn = lax.conv_dimension_numbers(x_nchw.shape, w1.shape, ("NCHW", "OIHW", "NCHW"))

    def bn(x, g, b, m, v):
        return (x - m[None, :, None, None]) / jnp.sqrt(v + eps)[None, :, None, None] \
               * g[None, :, None, None] + b[None, :, None, None]

    out = lax.conv_general_dilated(x_nchw, w1, (1, 1), ((1, 1), (1, 1)),
                                   dimension_numbers=dn)
    out = jnp.maximum(bn(out, g1, be1, m1, v1), 0.0)
    out = lax.conv_general_dilated(out, w2, (1, 1), ((1, 1), (1, 1)),
                                   dimension_numbers=dn)
    out = bn(out, g2, be2, m2, v2) + x_nchw
    return jnp.maximum(out, 0.0)


if __name__ == "__main__":
    key = jax.random.PRNGKey(0)
    N, C, Hsp, Wsp = 2, 4, 16, 16   # inplanes == planes == 4, stride=1, no downsample
    ks = jax.random.split(key, 8)

    x = jax.random.normal(ks[0], (N, C, Hsp, Wsp), dtype=jnp.float32)
    w1 = jax.random.normal(ks[1], (C, C, 3, 3), dtype=jnp.float32) * 0.1
    w2 = jax.random.normal(ks[2], (C, C, 3, 3), dtype=jnp.float32) * 0.1
    g1 = 1.0 + 0.1 * jax.random.normal(ks[3], (C,), dtype=jnp.float32)
    be1 = 0.1 * jax.random.normal(ks[4], (C,), dtype=jnp.float32)
    m1 = 0.1 * jax.random.normal(ks[5], (C,), dtype=jnp.float32)
    v1 = jnp.abs(1.0 + 0.1 * jax.random.normal(ks[6], (C,), dtype=jnp.float32))
    g2 = jnp.ones((C,), jnp.float32)
    be2 = jnp.zeros((C,), jnp.float32)
    m2 = 0.05 * jnp.ones((C,), jnp.float32)
    v2 = jnp.ones((C,), jnp.float32) * 1.2
    params = (w1, g1, be1, m1, v1, w2, g2, be2, m2, v2)

    ref = basic_block_reference(x, params)

    # f32-MXU path: checks the kernel math tightly.
    out_f32 = jax.block_until_ready(
        basic_block_pallas(x, params, matmul_dtype=jnp.float32))
    assert out_f32.shape == (N, C, Hsp, Wsp)
    err_f32 = float(jnp.max(jnp.abs(out_f32 - ref)))
    assert err_f32 < 2e-4, f"f32 path max abs err {err_f32}"

    # Default bf16 path (bf16 x/weights/slab, f32 accumulation/epilogue).
    out_bf16 = jax.block_until_ready(basic_block_pallas(x, params))
    err_bf16 = float(jnp.max(jnp.abs(out_bf16 - ref)))
    assert err_bf16 < 1e-1, f"bf16 path max abs err {err_bf16}"

    print("KERNEL_OK")
</pallas_src>

<mosaic_0001>
module attributes {stable_mosaic.version = 11 : i64} {
  func.func @_basic_block_kernel(%arg0: i32, %arg1: i32, %arg2: memref<1x8x4x128xf32, #tpu.memory_space<vmem>>, %arg3: memref<8x72xf32, #tpu.memory_space<vmem>>, %arg4: memref<8x1xf32, #tpu.memory_space<vmem>>, %arg5: memref<8x72xf32, #tpu.memory_space<vmem>>, %arg6: memref<8x1xf32, #tpu.memory_space<vmem>>, %arg7: memref<1x352xf32, #tpu.memory_space<vmem>>, %arg8: memref<1x352xf32, #tpu.memory_space<vmem>>, %arg9: memref<1x4x256xf32, #tpu.memory_space<vmem>>, %arg10: memref<72x320xf32, #tpu.memory_space<vmem>>) attributes {dimension_semantics = [#tpu.dimension_semantics<parallel>, #tpu.dimension_semantics<parallel>], iteration_bounds = array<i64: 2, 1>, scalar_prefetch = 0 : i64, scratch_operands = 1 : i64, tpu.core_type = #tpu.core_type<tc>, window_params = [{transform_indices = @transform_0, window_bounds = array<i64: 1, 8, 4, 128>}, {pipeline_mode = #tpu.pipeline_mode<synchronous>, transform_indices = @transform_1, window_bounds = array<i64: 8, 72>}, {pipeline_mode = #tpu.pipeline_mode<synchronous>, transform_indices = @transform_2, window_bounds = array<i64: 8, 1>}, {pipeline_mode = #tpu.pipeline_mode<synchronous>, transform_indices = @transform_3, window_bounds = array<i64: 8, 72>}, {pipeline_mode = #tpu.pipeline_mode<synchronous>, transform_indices = @transform_4, window_bounds = array<i64: 8, 1>}, {pipeline_mode = #tpu.pipeline_mode<synchronous>, transform_indices = @transform_5, window_bounds = array<i64: 1, 352>}, {pipeline_mode = #tpu.pipeline_mode<synchronous>, transform_indices = @transform_6, window_bounds = array<i64: 1, 352>}, {transform_indices = @transform_7, window_bounds = array<i64: 1, 4, 256>}]} {
    %c0 = arith.constant 0 : index
    %c0_0 = arith.constant 0 : index
    %c0_1 = arith.constant 0 : index
    %c0_2 = arith.constant 0 : index
    %0 = vector.load %arg2[%c0, %c0_0, %c0_1, %c0_2] : memref<1x8x4x128xf32, #tpu.memory_space<vmem>>, vector<1x8x4x128xf32>
    %1 = vector.shape_cast %0 : vector<1x8x4x128xf32> to vector<8x4x128xf32>
    %2 = vector.shape_cast %1 : vector<8x4x128xf32> to vector<8x512xf32>
    %c0_3 = arith.constant 0 : index
    %c0_4 = arith.constant 0 : index
    %3 = vector.load %arg7[%c0_3, %c0_4] : memref<1x352xf32, #tpu.memory_space<vmem>>, vector<1x352xf32>
    %c0_5 = arith.constant 0 : index
    %c0_6 = arith.constant 0 : index
    %4 = vector.load %arg8[%c0_5, %c0_6] : memref<1x352xf32, #tpu.memory_space<vmem>>, vector<1x352xf32>
    %5 = vector.extract_strided_slice %2 {offsets = [0, 15], sizes = [8, 352], strides = [1, 1]} : vector<8x512xf32> to vector<8x352xf32>
    %6 = vector.broadcast %3 : vector<1x352xf32> to vector<8x352xf32>
    %7 = arith.mulf %5, %6 : vector<8x352xf32>
    %8 = vector.extract_strided_slice %2 {offsets = [0, 16], sizes = [8, 352], strides = [1, 1]} : vector<8x512xf32> to vector<8x352xf32>
    %9 = vector.extract_strided_slice %2 {offsets = [0, 17], sizes = [8, 352], strides = [1, 1]} : vector<8x512xf32> to vector<8x352xf32>
    %10 = vector.broadcast %4 : vector<1x352xf32> to vector<8x352xf32>
    %11 = arith.mulf %9, %10 : vector<8x352xf32>
    %12 = vector.extract_strided_slice %7 {offsets = [0, 0], sizes = [8, 320], strides = [1, 1]} : vector<8x352xf32> to vector<8x320xf32>
    %c0_7 = arith.constant 0 : index
    %c0_8 = arith.constant 0 : index
    %13 = vector.load %arg10[%c0_7, %c0_8] : memref<72x320xf32, #tpu.memory_space<vmem>>, vector<8x320xf32>
    tpu.vector_store %arg10[%c0_7, %c0_8], %12 {strides = array<i32>} : memref<72x320xf32, #tpu.memory_space<vmem>>, vector<8x320xf32>,
    %14 = vector.extract_strided_slice %8 {offsets = [0, 0], sizes = [8, 320], strides = [1, 1]} : vector<8x352xf32> to vector<8x320xf32>
    %c8 = arith.constant 8 : index
    %c0_9 = arith.constant 0 : index
    %15 = vector.load %arg10[%c8, %c0_9] : memref<72x320xf32, #tpu.memory_space<vmem>>, vector<8x320xf32>
    tpu.vector_store %arg10[%c8, %c0_9], %14 {strides = array<i32>} : memref<72x320xf32, #tpu.memory_space<vmem>>, vector<8x320xf32>,
    %16 = vector.extract_strided_slice %11 {offsets = [0, 0], sizes = [8, 320], strides = [1, 1]} : vector<8x352xf32> to vector<8x320xf32>
    %c16 = arith.constant 16 : index
    %c0_10 = arith.constant 0 : index
    %17 = vector.load %arg10[%c16, %c0_10] : memref<72x320xf32, #tpu.memory_space<vmem>>, vector<8x320xf32>
    tpu.vector_store %arg10[%c16, %c0_10], %16 {strides = array<i32>} : memref<72x320xf32, #tpu.memory_space<vmem>>, vector<8x320xf32>,
    %18 = vector.extract_strided_slice %7 {offsets = [0, 16], sizes = [8, 320], strides = [1, 1]} : vector<8x352xf32> to vector<8x320xf32>
    %c24 = arith.constant 24 : index
    %c0_11 = arith.constant 0 : index
    %19 = vector.load %arg10[%c24, %c0_11] : memref<72x320xf32, #tpu.memory_space<vmem>>, vector<8x320xf32>
    tpu.vector_store %arg10[%c24, %c0_11], %18 {strides = array<i32>} : memref<72x320xf32, #tpu.memory_space<vmem>>, vector<8x320xf32>,
    %20 = vector.extract_strided_slice %8 {offsets = [0, 16], sizes = [8, 320], strides = [1, 1]} : vector<8x352xf32> to vector<8x320xf32>
    %c32 = arith.constant 32 : index
    %c0_12 = arith.constant 0 : index
    %21 = vector.load %arg10[%c32, %c0_12] : memref<72x320xf32, #tpu.memory_space<vmem>>, vector<8x320xf32>
    tpu.vector_store %arg10[%c32, %c0_12], %20 {strides = array<i32>} : memref<72x320xf32, #tpu.memory_space<vmem>>, vector<8x320xf32>,
    %22 = vector.extract_strided_slice %11 {offsets = [0, 16], sizes = [8, 320], strides = [1, 1]} : vector<8x352xf32> to vector<8x320xf32>
    %c40 = arith.constant 40 : index
    %c0_13 = arith.constant 0 : index
    %23 = vector.load %arg10[%c40, %c0_13] : memref<72x320xf32, #tpu.memory_space<vmem>>, vector<8x320xf32>
    tpu.vector_store %arg10[%c40, %c0_13], %22 {strides = array<i32>} : memref<72x320xf32, #tpu.memory_space<vmem>>, vector<8x320xf32>,
    %24 = vector.extract_strided_slice %7 {offsets = [0, 32], sizes = [8, 320], strides = [1, 1]} : vector<8x352xf32> to vector<8x320xf32>
    %c48 = arith.constant 48 : index
    %c0_14 = arith.constant 0 : index
    %25 = vector.load %arg10[%c48, %c0_14] : memref<72x320xf32, #tpu.memory_space<vmem>>, vector<8x320xf32>
    tpu.vector_store %arg10[%c48, %c0_14], %24 {strides = array<i32>} : memref<72x320xf32, #tpu.memory_space<vmem>>, vector<8x320xf32>,
    %26 = vector.extract_strided_slice %8 {offsets = [0, 32], sizes = [8, 320], strides = [1, 1]} : vector<8x352xf32> to vector<8x320xf32>
    %c56 = arith.constant 56 : index
    %c0_15 = arith.constant 0 : index
    %27 = vector.load %arg10[%c56, %c0_15] : memref<72x320xf32, #tpu.memory_space<vmem>>, vector<8x320xf32>
    tpu.vector_store %arg10[%c56, %c0_15], %26 {strides = array<i32>} : memref<72x320xf32, #tpu.memory_space<vmem>>, vector<8x320xf32>,
    %28 = vector.extract_strided_slice %11 {offsets = [0, 32], sizes = [8, 320], strides = [1, 1]} : vector<8x352xf32> to vector<8x320xf32>
    %c64 = arith.constant 64 : index
    %c0_16 = arith.constant 0 : index
    %29 = vector.load %arg10[%c64, %c0_16] : memref<72x320xf32, #tpu.memory_space<vmem>>, vector<8x320xf32>
    tpu.vector_store %arg10[%c64, %c0_16], %28 {strides = array<i32>} : memref<72x320xf32, #tpu.memory_space<vmem>>, vector<8x320xf32>,
    %c0_17 = arith.constant 0 : index
    %c0_18 = arith.constant 0 : index
    %30 = vector.load %arg3[%c0_17, %c0_18] : memref<8x72xf32, #tpu.memory_space<vmem>>, vector<8x72xf32>
    %c0_19 = arith.constant 0 : index
    %c0_20 = arith.constant 0 : index
    %31 = vector.load %arg10[%c0_19, %c0_20] : memref<72x320xf32, #tpu.memory_space<vmem>>, vector<72x320xf32>
    %cst = arith.constant dense<0.000000e+00> : vector<8x320xf32>
    %32 = tpu.matmul %30, %31, %cst {dimension_numbers = #tpu.dot_dimension_numbers<[1], [0], [0], [1], [0, 0, 1, 1], [], []>} : vector<8x72xf32>, vector<72x320xf32>, vector<8x320xf32> -> vector<8x320xf32>
    %c0_21 = arith.constant 0 : index
    %c0_22 = arith.constant 0 : index
    %33 = vector.load %arg4[%c0_21, %c0_22] : memref<8x1xf32, #tpu.memory_space<vmem>>, vector<8x1xf32>
    %34 = vector.broadcast %33 : vector<8x1xf32> to vector<8x320xf32>
    %35 = arith.addf %32, %34 : vector<8x320xf32>
    %cst_23 = arith.constant 0.000000e+00 : f32
    %36 = vector.broadcast %cst_23 : f32 to vector<8x320xf32>
    %37 = arith.maximumf %35, %36 : vector<8x320xf32>
    %38 = tpu.iota {dimensions = array<i32: 1>} : vector<1x320xi32>
    %c0_i32 = arith.constant 0 : i32
    %39 = arith.cmpi eq, %arg1, %c0_i32 : i32
    %c16_i32 = arith.constant 16 : i32
    %40 = vector.broadcast %c16_i32 : i32 to vector<1x320xi32>
    %41 = arith.cmpi sge, %38, %40 : vector<1x320xi32>
    %c32_i32 = arith.constant 32 : i32
    %42 = vector.broadcast %c32_i32 : i32 to vector<1x320xi32>
    %43 = arith.cmpi slt, %38, %42 : vector<1x320xi32>
    %44 = arith.andi %41, %43 : vector<1x320xi1>
    %45 = vector.broadcast %39 : i1 to vector<1x320xi1>
    %46 = arith.andi %45, %44 : vector<1x320xi1>
    %c0_i32_24 = arith.constant 0 : i32
    %47 = arith.cmpi eq, %arg1, %c0_i32_24 : i32
    %c288_i32 = arith.constant 288 : i32
    %48 = vector.broadcast %c288_i32 : i32 to vector<1x320xi32>
    %49 = arith.cmpi sge, %38, %48 : vector<1x320xi32>
    %c304_i32 = arith.constant 304 : i32
    %50 = vector.broadcast %c304_i32 : i32 to vector<1x320xi32>
    %51 = arith.cmpi slt, %38, %50 : vector<1x320xi32>
    %52 = arith.andi %49, %51 : vector<1x320xi1>
    %53 = vector.broadcast %47 : i1 to vector<1x320xi1>
    %54 = arith.andi %53, %52 : vector<1x320xi1>
    %55 = arith.ori %46, %54 : vector<1x320xi1>
    %cst_25 = arith.constant 0.000000e+00 : f32
    %56 = vector.shape_cast %55 : vector<1x320xi1> to vector<1x320xi1>
    %57 = vector.broadcast %56 : vector<1x320xi1> to vector<8x320xi1>
    %58 = vector.broadcast %cst_25 : f32 to vector<8x320xf32>
    %59 = arith.select %57, %58, %37 : vector<8x320xi1>, vector<8x320xf32>
    %60 = vector.extract_strided_slice %59 {offsets = [0, 15], sizes = [8, 288], strides = [1, 1]} : vector<8x320xf32> to vector<8x288xf32>
    %61 = vector.extract_strided_slice %3 {offsets = [0, 0], sizes = [1, 288], strides = [1, 1]} : vector<1x352xf32> to vector<1x288xf32>
    %62 = vector.broadcast %61 : vector<1x288xf32> to vector<8x288xf32>
    %63 = arith.mulf %60, %62 : vector<8x288xf32>
    %64 = vector.extract_strided_slice %59 {offsets = [0, 16], sizes = [8, 288], strides = [1, 1]} : vector<8x320xf32> to vector<8x288xf32>
    %65 = vector.extract_strided_slice %59 {offsets = [0, 17], sizes = [8, 288], strides = [1, 1]} : vector<8x320xf32> to vector<8x288xf32>
    %66 = vector.extract_strided_slice %4 {offsets = [0, 0], sizes = [1, 288], strides = [1, 1]} : vector<1x352xf32> to vector<1x288xf32>
    %67 = vector.broadcast %66 : vector<1x288xf32> to vector<8x288xf32>
    %68 = arith.mulf %65, %67 : vector<8x288xf32>
    %69 = vector.extract_strided_slice %63 {offsets = [0, 0], sizes = [8, 256], strides = [1, 1]} : vector<8x288xf32> to vector<8x256xf32>
    %c0_26 = arith.constant 0 : index
    %c0_27 = arith.constant 0 : index
    %70 = vector.load %arg10[%c0_26, %c0_27] : memref<72x320xf32, #tpu.memory_space<vmem>>, vector<8x256xf32>
    tpu.vector_store %arg10[%c0_26, %c0_27], %69 {strides = array<i32>} : memref<72x320xf32, #tpu.memory_space<vmem>>, vector<8x256xf32>,
    %71 = vector.extract_strided_slice %64 {offsets = [0, 0], sizes = [8, 256], strides = [1, 1]} : vector<8x288xf32> to vector<8x256xf32>
    %c8_28 = arith.constant 8 : index
    %c0_29 = arith.constant 0 : index
    %72 = vector.load %arg10[%c8_28, %c0_29] : memref<72x320xf32, #tpu.memory_space<vmem>>, vector<8x256xf32>
    tpu.vector_store %arg10[%c8_28, %c0_29], %71 {strides = array<i32>} : memref<72x320xf32, #tpu.memory_space<vmem>>, vector<8x256xf32>,
    %73 = vector.extract_strided_slice %68 {offsets = [0, 0], sizes = [8, 256], strides = [1, 1]} : vector<8x288xf32> to vector<8x256xf32>
    %c16_30 = arith.constant 16 : index
    %c0_31 = arith.constant 0 : index
    %74 = vector.load %arg10[%c16_30, %c0_31] : memref<72x320xf32, #tpu.memory_space<vmem>>, vector<8x256xf32>
    tpu.vector_store %arg10[%c16_30, %c0_31], %73 {strides = array<i32>} : memref<72x320xf32, #tpu.memory_space<vmem>>, vector<8x256xf32>,
    %75 = vector.extract_strided_slice %63 {offsets = [0, 16], sizes = [8, 256], strides = [1, 1]} : vector<8x288xf32> to vector<8x256xf32>
    %c24_32 = arith.constant 24 : index
    %c0_33 = arith.constant 0 : index
    %76 = vector.load %arg10[%c24_32, %c0_33] : memref<72x320xf32, #tpu.memory_space<vmem>>, vector<8x256xf32>
    tpu.vector_store %arg10[%c24_32, %c0_33], %75 {strides = array<i32>} : memref<72x320xf32, #tpu.memory_space<vmem>>, vector<8x256xf32>,
    %77 = vector.extract_strided_slice %64 {offsets = [0, 16], sizes = [8, 256], strides = [1, 1]} : vector<8x288xf32> to vector<8x256xf32>
    %c32_34 = arith.constant 32 : index
    %c0_35 = arith.constant 0 : index
    %78 = vector.load %arg10[%c32_34, %c0_35] : memref<72x320xf32, #tpu.memory_space<vmem>>, vector<8x256xf32>
    tpu.vector_store %arg10[%c32_34, %c0_35], %77 {strides = array<i32>} : memref<72x320xf32, #tpu.memory_space<vmem>>, vector<8x256xf32>,
    %79 = vector.extract_strided_slice %68 {offsets = [0, 16], sizes = [8, 256], strides = [1, 1]} : vector<8x288xf32> to vector<8x256xf32>
    %c40_36 = arith.constant 40 : index
    %c0_37 = arith.constant 0 : index
    %80 = vector.load %arg10[%c40_36, %c0_37] : memref<72x320xf32, #tpu.memory_space<vmem>>, vector<8x256xf32>
    tpu.vector_store %arg10[%c40_36, %c0_37], %79 {strides = array<i32>} : memref<72x320xf32, #tpu.memory_space<vmem>>, vector<8x256xf32>,
    %81 = vector.extract_strided_slice %63 {offsets = [0, 32], sizes = [8, 256], strides = [1, 1]} : vector<8x288xf32> to vector<8x256xf32>
    %c48_38 = arith.constant 48 : index
    %c0_39 = arith.constant 0 : index
    %82 = vector.load %arg10[%c48_38, %c0_39] : memref<72x320xf32, #tpu.memory_space<vmem>>, vector<8x256xf32>
    tpu.vector_store %arg10[%c48_38, %c0_39], %81 {strides = array<i32>} : memref<72x320xf32, #tpu.memory_space<vmem>>, vector<8x256xf32>,
    %83 = vector.extract_strided_slice %64 {offsets = [0, 32], sizes = [8, 256], strides = [1, 1]} : vector<8x288xf32> to vector<8x256xf32>
    %c56_40 = arith.constant 56 : index
    %c0_41 = arith.constant 0 : index
    %84 = vector.load %arg10[%c56_40, %c0_41] : memref<72x320xf32, #tpu.memory_space<vmem>>, vector<8x256xf32>
    tpu.vector_store %arg10[%c56_40, %c0_41], %83 {strides = array<i32>} : memref<72x320xf32, #tpu.memory_space<vmem>>, vector<8x256xf32>,
    %85 = vector.extract_strided_slice %68 {offsets = [0, 32], sizes = [8, 256], strides = [1, 1]} : vector<8x288xf32> to vector<8x256xf32>
    %c64_42 = arith.constant 64 : index
    %c0_43 = arith.constant 0 : index
    %86 = vector.load %arg10[%c64_42, %c0_43] : memref<72x320xf32, #tpu.memory_space<vmem>>, vector<8x256xf32>
    tpu.vector_store %arg10[%c64_42, %c0_43], %85 {strides = array<i32>} : memref<72x320xf32, #tpu.memory_space<vmem>>, vector<8x256xf32>,
    %c0_44 = arith.constant 0 : index
    %c0_45 = arith.constant 0 : index
    %87 = vector.load %arg5[%c0_44, %c0_45] : memref<8x72xf32, #tpu.memory_space<vmem>>, vector<8x72xf32>
    %c0_46 = arith.constant 0 : index
    %c0_47 = arith.constant 0 : index
    %88 = vector.load %arg10[%c0_46, %c0_47] : memref<72x320xf32, #tpu.memory_space<vmem>>, vector<72x256xf32>
    %cst_48 = arith.constant dense<0.000000e+00> : vector<8x256xf32>
    %89 = tpu.matmul %87, %88, %cst_48 {dimension_numbers = #tpu.dot_dimension_numbers<[1], [0], [0], [1], [0, 0, 1, 1], [], []>} : vector<8x72xf32>, vector<72x256xf32>, vector<8x256xf32> -> vector<8x256xf32>
    %90 = vector.extract_strided_slice %2 {offsets = [0, 64], sizes = [8, 256], strides = [1, 1]} : vector<8x512xf32> to vector<8x256xf32>
    %c0_49 = arith.constant 0 : index
    %c0_50 = arith.constant 0 : index
    %91 = vector.load %arg6[%c0_49, %c0_50] : memref<8x1xf32, #tpu.memory_space<vmem>>, vector<8x1xf32>
    %92 = vector.broadcast %91 : vector<8x1xf32> to vector<8x256xf32>
    %93 = arith.addf %89, %92 : vector<8x256xf32>
    %94 = arith.addf %93, %90 : vector<8x256xf32>
    %cst_51 = arith.constant 0.000000e+00 : f32
    %95 = vector.broadcast %cst_51 : f32 to vector<8x256xf32>
    %96 = arith.maximumf %94, %95 : vector<8x256xf32>
    %97 = vector.extract_strided_slice %96 {offsets = [0, 0], sizes = [4, 256], strides = [1, 1]} : vector<8x256xf32> to vector<4x256xf32>
    %c0_52 = arith.constant 0 : index
    %c0_53 = arith.constant 0 : index
    %c0_54 = arith.constant 0 : index
    %98 = vector.load %arg9[%c0_52, %c0_53, %c0_54] : memref<1x4x256xf32, #tpu.memory_space<vmem>>, vector<1x4x256xf32>
    %99 = vector.shape_cast %98 : vector<1x4x256xf32> to vector<4x256xf32>
    %100 = vector.shape_cast %97 : vector<4x256xf32> to vector<1x4x256xf32>
    tpu.vector_store %arg9[%c0_52, %c0_53, %c0_54], %100 {strides = array<i32>} : memref<1x4x256xf32, #tpu.memory_space<vmem>>, vector<1x4x256xf32>,
    return
  }
  func.func @transform_0(%arg0: i32, %arg1: i32) -> (i32, i32, i32, i32) {
    %c0_i32 = arith.constant 0 : i32
    %c0_i32_0 = arith.constant 0 : i32
    %c0_i32_1 = arith.constant 0 : i32
    %c0_i32_2 = arith.constant 0 : i32
    return %arg0, %c0_i32, %c0_i32_0, %c0_i32_1 : i32, i32, i32, i32
  }
  func.func @transform_1(%arg0: i32, %arg1: i32) -> (i32, i32) {
    %c0_i32 = arith.constant 0 : i32
    %c0_i32_0 = arith.constant 0 : i32
    %c0_i32_1 = arith.constant 0 : i32
    return %c0_i32, %c0_i32_0 : i32, i32
  }
  func.func @transform_2(%arg0: i32, %arg1: i32) -> (i32, i32) {
    %c0_i32 = arith.constant 0 : i32
    %c0_i32_0 = arith.constant 0 : i32
    %c0_i32_1 = arith.constant 0 : i32
    return %c0_i32, %c0_i32_0 : i32, i32
  }
  func.func @transform_3(%arg0: i32, %arg1: i32) -> (i32, i32) {
    %c0_i32 = arith.constant 0 : i32
    %c0_i32_0 = arith.constant 0 : i32
    %c0_i32_1 = arith.constant 0 : i32
    return %c0_i32, %c0_i32_0 : i32, i32
  }
  func.func @transform_4(%arg0: i32, %arg1: i32) -> (i32, i32) {
    %c0_i32 = arith.constant 0 : i32
    %c0_i32_0 = arith.constant 0 : i32
    %c0_i32_1 = arith.constant 0 : i32
    return %c0_i32, %c0_i32_0 : i32, i32
  }
  func.func @transform_5(%arg0: i32, %arg1: i32) -> (i32, i32) {
    %c0_i32 = arith.constant 0 : i32
    %c0_i32_0 = arith.constant 0 : i32
    %c0_i32_1 = arith.constant 0 : i32
    return %c0_i32, %c0_i32_0 : i32, i32
  }
  func.func @transform_6(%arg0: i32, %arg1: i32) -> (i32, i32) {
    %c0_i32 = arith.constant 0 : i32
    %c0_i32_0 = arith.constant 0 : i32
    %c0_i32_1 = arith.constant 0 : i32
    return %c0_i32, %c0_i32_0 : i32, i32
  }
  func.func @transform_7(%arg0: i32, %arg1: i32) -> (i32, i32, i32) {
    %c0_i32 = arith.constant 0 : i32
    %c0_i32_0 = arith.constant 0 : i32
    return %arg0, %c0_i32, %arg1 : i32, i32, i32
  }
}

</mosaic_0001>

<llo_original>
// kernel: tpu_custom_call.1
$region0: #{tpu_custom_call.1}
  #allocation0 [shape = 'u32[]', space=smem, size = 0x4, offset = 0x4, fixed_abs, tag = 'smem constant byte address 0x4 - core index']
  #allocation1 [shape = 'u32[144,128]{1,0:T(1,128)}', space=vmem, size = 0x12000, scoped, tag = 'internal scratch']
  #allocation2 [shape = 'f32[72,320]{1,0:T(8,128)}', space=vmem, size = 0x1b000, scoped, tag = 'scratch operand']
  %s0 = inlined_call_operand.hbm [shape: f32[2,8,4,128], index: 0, kind: input, shape index: {}]
  %s1 = inlined_call_operand.vmem [shape: f32[8,72], index: 1, kind: input, shape index: {}]
  %s2 = inlined_call_operand.vmem [shape: f32[8,1], index: 2, kind: input, shape index: {}]
  %s3 = inlined_call_operand.vmem [shape: f32[8,72], index: 3, kind: input, shape index: {}]
  %s4 = inlined_call_operand.vmem [shape: f32[8,1], index: 4, kind: input, shape index: {}]
  %s5 = inlined_call_operand.vmem [shape: f32[1,352], index: 5, kind: input, shape index: {}]
  %s6 = inlined_call_operand.vmem [shape: f32[1,352], index: 6, kind: input, shape index: {}]
  %s7 = inlined_call_operand.hbm [shape: f32[2,4,256], index: 7, kind: output, shape index: {}]
  %s8 = sld [smem:[#allocation0]]
  $region65: #{tpu_custom_call.1} parent=0
    _
  %s10 = ssub.s32 1, %s8
  %s11 = scalar_select 0, %s10, %s8
  $region1: #{tpu_custom_call.1} parent=0
    #allocation3 [shape = 'u8[32768]{0}', space=vmem, size = 0x8000, scoped, tag = 'input window, operand 0']
    #allocation4 [shape = 's32[2]{0}', space=sflag, size = 0x8, scoped, tag = 'scoped memory for tpu_custom_call.1']
    #allocation5 [shape = 's32[2]{0}', space=sflag, size = 0x8, scoped, tag = 'scoped memory for tpu_custom_call.1']
    #allocation6 [shape = 'u8[8192]{0}', space=vmem, size = 0x2000, scoped, tag = 'output window, operand 0']
    %12 = vsyncpa [#allocation4], 0
    %s13 = scalar_lea.sflag [#allocation4], 1
    %14 = vsyncpa %s13, 0
    %15 = vsyncpa [#allocation5], 0
    %s16 = scalar_lea.sflag [#allocation5], 1
    %17 = vsyncpa %s16, 0
    loop: start=0, step=1, limit=4
    $region2: #{tpu_custom_call.1} parent=1 // loop_pre_header
      _
    $region3: #{tpu_custom_call.1} parent=1 // loop_header
      %s19 = sphi 0, %s23
      %p20 = scmp.ge.s32.totalorder %s19, 4
      %s26 = sphi 0, %s38
      %s27 = sphi 0, %s34
      %s28 = sphi 0, %s26
      %s29 = sphi 0, %s27
      %s30 = sphi 0, %s28
      %s31 = sphi 0, %s29
      %s41 = sphi 0, %s43
      %s44 = sphi 0, %s41
      %s45 = sphi 0, %s44
      %s61 = sphi 0, %s45
      %s65 = sphi 0, %s65
      %s67 = sphi 0, %s65
      %s68 = sphi 0, %s67
      %s82 = sphi 0, %s68
      %s86 = sphi 0, %s86
      %s88 = sphi 0, %s86
      %s89 = sphi 0, %s88
      %s103 = sphi 0, %s89
      %s107 = sphi 0, %s107
      %s109 = sphi 0, %s107
      %s110 = sphi 0, %s109
      %s124 = sphi 0, %s110
      %s128 = sphi 0, %s128
      %s130 = sphi 0, %s128
      %s131 = sphi 0, %s130
      %s145 = sphi 0, %s131
      %s149 = sphi 0, %s149
      %s151 = sphi 0, %s149
      %s152 = sphi 0, %s151
      %s166 = sphi 0, %s152
      %s170 = sphi 0, %s170
      %s172 = sphi 0, %s170
      %s173 = sphi 0, %s172
      %s187 = sphi 0, %s173
      %s195 = sphi 0, %s197
      %s198 = sphi 0, %s195
      %s199 = sphi 0, %s198
      %s215 = sphi 0, %s199
    $region4: #{tpu_custom_call.1} parent=1 // loop_header_branch
      %22 = sbr.rel (%p20) target = $region8
    $region5: #{tpu_custom_call.1} parent=1 // loop_body
      %s24 = ssub.s32 %s19, 1
      %s25 = ssub.s32 %s19, 2
      %s32 = sadd.s32 1, %s27
      %p33 = scmp.ge.s32.totalorder %s32, 1
      %s34 = scalar_select %p33, 0, %s32
      %s35 = sadd.s32 1, %s26
      %s36 = scalar_select %p33, %s35, %s26
      %p37 = scmp.ge.s32.totalorder %s36, 2
      %s38 = scalar_select %p37, 0, %s36
      %s39 = ssub.s32 %s26, %s38
      %p40 = scmp.eq.s32.totalorder %s39, 0
      %s42 = sadd.s32 %s41, 1
      %s43 = scalar_select %p40, %s41, %s42
      %p46 = pneg %p40
      %p47 = scmp.eq.s32.totalorder %s19, 1
      %p48 = por %p46, %p47
      %p49 = scmp.ne.s32.totalorder %s41, %s44
      %p50 = scmp.eq.s32.totalorder %s19, 0
      %p51 = por %p49, %p50
      %p52 = scmp.ne.s32.totalorder %s41, %s44
      %p53 = scmp.eq.s32.totalorder %s24, 1
      %p54 = por %p52, %p53
      %p55 = scmp.ne.s32.totalorder %s44, %s45
      %p56 = scmp.eq.s32.totalorder %s24, 0
      %p57 = por %p55, %p56
      %p58 = scmp.ne.s32.totalorder %s44, %s45
      %p59 = scmp.eq.s32.totalorder %s25, 1
      %p60 = por %p58, %p59
      %p62 = scmp.ne.s32.totalorder %s45, %s61
      %p63 = scmp.eq.s32.totalorder %s25, 0
      %p64 = por %p62, %p63
      %s66 = sadd.s32 %s65, 1
      %p69 = scmp.eq.s32.totalorder %s19, 1
      %p70 = scmp.ne.s32.totalorder %s65, %s67
      %p71 = scmp.eq.s32.totalorder %s19, 0
      %p72 = por %p70, %p71
      %p73 = scmp.ne.s32.totalorder %s65, %s67
      %p74 = scmp.eq.s32.totalorder %s24, 1
      %p75 = por %p73, %p74
      %p76 = scmp.ne.s32.totalorder %s67, %s68
      %p77 = scmp.eq.s32.totalorder %s24, 0
      %p78 = por %p76, %p77
      %p79 = scmp.ne.s32.totalorder %s67, %s68
      %p80 = scmp.eq.s32.totalorder %s25, 1
      %p81 = por %p79, %p80
      %p83 = scmp.ne.s32.totalorder %s68, %s82
      %p84 = scmp.eq.s32.totalorder %s25, 0
      %p85 = por %p83, %p84
      %s87 = sadd.s32 %s86, 1
      %p90 = scmp.eq.s32.totalorder %s19, 1
      %p91 = scmp.ne.s32.totalorder %s86, %s88
      %p92 = scmp.eq.s32.totalorder %s19, 0
      %p93 = por %p91, %p92
      %p94 = scmp.ne.s32.totalorder %s86, %s88
      %p95 = scmp.eq.s32.totalorder %s24, 1
      %p96 = por %p94, %p95
      %p97 = scmp.ne.s32.totalorder %s88, %s89
      %p98 = scmp.eq.s32.totalorder %s24, 0
      %p99 = por %p97, %p98
      %p100 = scmp.ne.s32.totalorder %s88, %s89
      %p101 = scmp.eq.s32.totalorder %s25, 1
      %p102 = por %p100, %p101
      %p104 = scmp.ne.s32.totalorder %s89, %s103
      %p105 = scmp.eq.s32.totalorder %s25, 0
      %p106 = por %p104, %p105
      %s108 = sadd.s32 %s107, 1
      %p111 = scmp.eq.s32.totalorder %s19, 1
      %p112 = scmp.ne.s32.totalorder %s107, %s109
      %p113 = scmp.eq.s32.totalorder %s19, 0
      %p114 = por %p112, %p113
      %p115 = scmp.ne.s32.totalorder %s107, %s109
      %p116 = scmp.eq.s32.totalorder %s24, 1
      %p117 = por %p115, %p116
      %p118 = scmp.ne.s32.totalorder %s109, %s110
      %p119 = scmp.eq.s32.totalorder %s24, 0
      %p120 = por %p118, %p119
      %p121 = scmp.ne.s32.totalorder %s109, %s110
      %p122 = scmp.eq.s32.totalorder %s25, 1
      %p123 = por %p121, %p122
      %p125 = scmp.ne.s32.totalorder %s110, %s124
      %p126 = scmp.eq.s32.totalorder %s25, 0
      %p127 = por %p125, %p126
      %s129 = sadd.s32 %s128, 1
      %p132 = scmp.eq.s32.totalorder %s19, 1
      %p133 = scmp.ne.s32.totalorder %s128, %s130
      %p134 = scmp.eq.s32.totalorder %s19, 0
      %p135 = por %p133, %p134
      %p136 = scmp.ne.s32.totalorder %s128, %s130
      %p137 = scmp.eq.s32.totalorder %s24, 1
      %p138 = por %p136, %p137
      %p139 = scmp.ne.s32.totalorder %s130, %s131
      %p140 = scmp.eq.s32.totalorder %s24, 0
      %p141 = por %p139, %p140
      %p142 = scmp.ne.s32.totalorder %s130, %s131
      %p143 = scmp.eq.s32.totalorder %s25, 1
      %p144 = por %p142, %p143
      %p146 = scmp.ne.s32.totalorder %s131, %s145
      %p147 = scmp.eq.s32.totalorder %s25, 0
      %p148 = por %p146, %p147
      %s150 = sadd.s32 %s149, 1
      %p153 = scmp.eq.s32.totalorder %s19, 1
      %p154 = scmp.ne.s32.totalorder %s149, %s151
      %p155 = scmp.eq.s32.totalorder %s19, 0
      %p156 = por %p154, %p155
      %p157 = scmp.ne.s32.totalorder %s149, %s151
      %p158 = scmp.eq.s32.totalorder %s24, 1
      %p159 = por %p157, %p158
      %p160 = scmp.ne.s32.totalorder %s151, %s152
      %p161 = scmp.eq.s32.totalorder %s24, 0
      %p162 = por %p160, %p161
      %p163 = scmp.ne.s32.totalorder %s151, %s152
      %p164 = scmp.eq.s32.totalorder %s25, 1
      %p165 = por %p163, %p164
      %p167 = scmp.ne.s32.totalorder %s152, %s166
      %p168 = scmp.eq.s32.totalorder %s25, 0
      %p169 = por %p167, %p168
      %s171 = sadd.s32 %s170, 1
      %p174 = scmp.eq.s32.totalorder %s19, 1
      %p175 = scmp.ne.s32.totalorder %s170, %s172
      %p176 = scmp.eq.s32.totalorder %s19, 0
      %p177 = por %p175, %p176
      %p178 = scmp.ne.s32.totalorder %s170, %s172
      %p179 = scmp.eq.s32.totalorder %s24, 1
      %p180 = por %p178, %p179
      %p181 = scmp.ne.s32.totalorder %s172, %s173
      %p182 = scmp.eq.s32.totalorder %s24, 0
      %p183 = por %p181, %p182
      %p184 = scmp.ne.s32.totalorder %s172, %s173
      %p185 = scmp.eq.s32.totalorder %s25, 1
      %p186 = por %p184, %p185
      %p188 = scmp.ne.s32.totalorder %s173, %s187
      %p189 = scmp.eq.s32.totalorder %s25, 0
      %p190 = por %p188, %p189
      %s191 = ssub.s32 %s26, %s38
      %s192 = ssub.s32 %s27, %s34
      %s193 = sor.u32 %s191, %s192
      %p194 = scmp.eq.s32.totalorder %s193, 0
      %s196 = sadd.s32 %s195, 1
      %s197 = scalar_select %p194, %s195, %s196
      %p200 = pneg %p194
      %p201 = scmp.eq.s32.totalorder %s19, 1
      %p202 = por %p200, %p201
      %p203 = scmp.ne.s32.totalorder %s195, %s198
      %p204 = scmp.eq.s32.totalorder %s19, 0
      %p205 = por %p203, %p204
      %p206 = scmp.ne.s32.totalorder %s195, %s198
      %p207 = scmp.eq.s32.totalorder %s24, 1
      %p208 = por %p206, %p207
      %p209 = scmp.ne.s32.totalorder %s198, %s199
      %p210 = scmp.eq.s32.totalorder %s24, 0
      %p211 = por %p209, %p210
      %p212 = scmp.ne.s32.totalorder %s198, %s199
      %p213 = scmp.eq.s32.totalorder %s25, 1
      %p214 = por %p212, %p213
      %p216 = scmp.ne.s32.totalorder %s199, %s215
      %p217 = scmp.eq.s32.totalorder %s25, 0
      %p218 = por %p216, %p217
      %p219 = scmp.le.s32.totalorder 1, %s19
      %p220 = scmp.lt.s32.totalorder %s19, 3
      %p221 = pnand %p219, %p220
      %p222 = pneg %p221
      // Predicated region
      $region9: #{tpu_custom_call.1} parent=5 // pred_check
        _
      $region10: #{tpu_custom_call.1} parent=5 // pred_check_branch
        %224 = sbr.rel (%p221) target = $region12
      $region11: #{tpu_custom_call.1} parent=5 // pred_region
        %s225 = ssub.s32 %s19, 1
        // Predicated region
        $region13: #{tpu_custom_call.1} parent=11 // pred_check
          %p226 = pneg %p78
        $region14: #{tpu_custom_call.1} parent=11 // pred_check_branch
          %228 = sbr.rel (%p226) target = $region16
        $region15: #{tpu_custom_call.1} parent=11 // pred_region
          _
        $region16: #{tpu_custom_call.1} parent=11 // pred_fallthru
          _
        // Predicated region
        $region17: #{tpu_custom_call.1} parent=11 // pred_check
          %p229 = pneg %p99
        $region18: #{tpu_custom_call.1} parent=11 // pred_check_branch
          %231 = sbr.rel (%p229) target = $region20
        $region19: #{tpu_custom_call.1} parent=11 // pred_region
          _
        $region20: #{tpu_custom_call.1} parent=11 // pred_fallthru
          _
        // Predicated region
        $region21: #{tpu_custom_call.1} parent=11 // pred_check
          %p232 = pneg %p120
        $region22: #{tpu_custom_call.1} parent=11 // pred_check_branch
          %234 = sbr.rel (%p232) target = $region24
        $region23: #{tpu_custom_call.1} parent=11 // pred_region
          _
        $region24: #{tpu_custom_call.1} parent=11 // pred_fallthru
          _
        // Predicated region
        $region25: #{tpu_custom_call.1} parent=11 // pred_check
          %p235 = pneg %p141
        $region26: #{tpu_custom_call.1} parent=11 // pred_check_branch
          %237 = sbr.rel (%p235) target = $region28
        $region27: #{tpu_custom_call.1} parent=11 // pred_region
          _
        $region28: #{tpu_custom_call.1} parent=11 // pred_fallthru
          _
        // Predicated region
        $region29: #{tpu_custom_call.1} parent=11 // pred_check
          %p238 = pneg %p162
        $region30: #{tpu_custom_call.1} parent=11 // pred_check_branch
          %240 = sbr.rel (%p238) target = $region32
        $region31: #{tpu_custom_call.1} parent=11 // pred_region
          _
        $region32: #{tpu_custom_call.1} parent=11 // pred_fallthru
          _
        // Predicated region
        $region33: #{tpu_custom_call.1} parent=11 // pred_check
          %p241 = pneg %p183
        $region34: #{tpu_custom_call.1} parent=11 // pred_check_branch
          %243 = sbr.rel (%p241) target = $region36
        $region35: #{tpu_custom_call.1} parent=11 // pred_region
          _
        $region36: #{tpu_custom_call.1} parent=11 // pred_fallthru
          _
      $region12: #{tpu_custom_call.1} parent=5 // pred_fallthru
        _
      %p244 = scmp.lt.s32.totalorder %s19, 2
      // Predicated region
      $region37: #{tpu_custom_call.1} parent=5 // pred_check
        %p245 = pneg %p244
      $region38: #{tpu_custom_call.1} parent=5 // pred_check_branch
        %247 = sbr.rel (%p245) target = $region40
      $region39: #{tpu_custom_call.1} parent=5 // pred_region
        // Predicated region
        $region41: #{tpu_custom_call.1} parent=39 // pred_check
          %p248 = pneg %p51
        $region42: #{tpu_custom_call.1} parent=39 // pred_check_branch
          %250 = sbr.rel (%p248) target = $region44
        $region43: #{tpu_custom_call.1} parent=39 // pred_region
          %s251 = sand.u32 %s41, 1
          %s252 = scalar_lea.sflag [#allocation4], %s251
          %s253 = sand.u32 %s41, 1
          %s254 = smul.addr %s253, 32
          %s255 = scalar_lea.vmem [#allocation3], %s254
          %s257 = ssub.s32 512, 512
          %258 = vsyncadd %s252, %s257
          %s259 = smul.addr %s26, 8
          %s260 = smul.addr %s259, 64
          %s261 = scalar_lea.hbm %s0, %s260
          %s262 = sshll.u32 %s255, 4
          %s263 = int_to_ptr.vmem [resolvable:$true] %s262
          %268 = dma.hbm_to_vmem [thread:$0]  %s261, 512, %s263, %s252, 64, 64, 4
        $region44: #{tpu_custom_call.1} parent=39 // pred_fallthru
          _
      $region40: #{tpu_custom_call.1} parent=5 // pred_fallthru
        _
      %p269 = scmp.le.s32.totalorder 1, %s19
      %p270 = scmp.lt.s32.totalorder %s19, 3
      %p271 = pnand %p269, %p270
      %p272 = pneg %p271
      // Predicated region
      $region45: #{tpu_custom_call.1} parent=5 // pred_check
        _
      $region46: #{tpu_custom_call.1} parent=5 // pred_check_branch
        %274 = sbr.rel (%p271) target = $region48
      $region47: #{tpu_custom_call.1} parent=5 // pred_region
        %s275 = ssub.s32 %s19, 1
        %s276 = sand.u32 %s44, 1
        %s277 = scalar_lea.sflag [#allocation4], %s276
        %s278 = sand.u32 %s44, 1
        %s279 = smul.addr %s278, 32
        %s280 = scalar_lea.vmem [#allocation3], %s279
        // Predicated region
        $region49: #{tpu_custom_call.1} parent=47 // pred_check
          %p281 = pneg %p57
        $region50: #{tpu_custom_call.1} parent=47 // pred_check_branch
          %283 = sbr.rel (%p281) target = $region52
        $region51: #{tpu_custom_call.1} parent=47 // pred_region
          %284 = dma.done %s277, 512
        $region52: #{tpu_custom_call.1} parent=47 // pred_fallthru
          _
        %s285 = sand.u32 %s44, 1
        %s286 = scalar_lea.sflag [#allocation4], %s285
        %s287 = sand.u32 %s44, 1
        %s288 = smul.addr %s287, 32
        %s289 = scalar_lea.vmem [#allocation3], %s288
        %p290 = pneg %p57
        %p291 = pneg %p54
        %p292 = pneg %p78
        %p293 = pneg %p75
        %p294 = pneg %p99
        %p295 = pneg %p96
        %p296 = pneg %p120
        %p297 = pneg %p117
        %p298 = pneg %p141
        %p299 = pneg %p138
        %p300 = pneg %p162
        %p301 = pneg %p159
        %p302 = pneg %p183
        %p303 = pneg %p180
        %p304 = pneg %p211
        %p305 = pneg %p208
        %s306 = sand.u32 %s198, 1
        %s307 = scalar_lea.sflag [#allocation5], %s306
        %s308 = sand.u32 %s198, 1
        %s309 = smul.addr %s308, 8
        %s310 = scalar_lea.vmem [#allocation6], %s309
        %s311 = smul.u32 2, %s29
        %v312 = vld [vmem:[%s280] ss:$4 sm:$0xff]
        %s313 = scalar_lea.vmem %s280, 1 [#allocation3]
        %v314 = vld [vmem:[%s313] ss:$4 sm:$0xff]
        %s315 = scalar_lea.vmem %s280, 2 [#allocation3]
        %v316 = vld [vmem:[%s315] ss:$4 sm:$0xff]
        %v320 = vld [vmem:[%s5] sm:$0x7]
        %v321 = vld [vmem:[%s6] sm:$0x7]
        %v323 = vlaneseq
        %v324 = vshrl.u32 %v323, 7
        %v325 = vsub.s32 0, %v324
        %v326 = vrot.slane %v320, %v325
        %v327 = vlaneseq
        %v328 = vshrl.u32 %v327, 7
        %v329 = vsub.s32 1, %v328
        %v330 = vrot.slane %v320, %v329
        %v331 = vlaneseq
        %v332 = vshrl.u32 %v331, 7
        %v333 = vsub.s32 2, %v332
        %v334 = vrot.slane %v320, %v333
        %335 = vrot.lane.b32.xlu0 %v326, 15
        %v336 = vpop.permute.xlu0 %335
        %337 = vrot.lane.b32.xlu0 %v330, 15
        %v338 = vpop.permute.xlu0 %337
        %339 = vrot.lane.b32.xlu0 %v334, 15
        %v340 = vpop.permute.xlu0 %339
        %vm341 = vcmask 121856
        %v342 = vsel %vm341, %v336, %v338
        %v343 = vsel %vm341, %v338, %v340
        %v347 = vmul.f32 %v312, %v336
        %v348 = vmul.f32 %v314, %v342
        %v349 = vmul.f32 %v316, %v343
        %v351 = vlaneseq
        %v352 = vshrl.u32 %v351, 7
        %v353 = vsub.s32 0, %v352
        %v354 = vrot.slane %v321, %v353
        %v355 = vlaneseq
        %v356 = vshrl.u32 %v355, 7
        %v357 = vsub.s32 1, %v356
        %v358 = vrot.slane %v321, %v357
        %v359 = vlaneseq
        %v360 = vshrl.u32 %v359, 7
        %v361 = vsub.s32 2, %v360
        %v362 = vrot.slane %v321, %v361
        %363 = vrot.lane.b32.xlu0 %v354, 17
        %v364 = vpop.permute.xlu0 %363
        %365 = vrot.lane.b32.xlu0 %v358, 17
        %v366 = vpop.permute.xlu0 %365
        %367 = vrot.lane.b32.xlu0 %v362, 17
        %v368 = vpop.permute.xlu0 %367
        %vm369 = vcmask 138240
        %v370 = vsel %vm369, %v364, %v366
        %v371 = vsel %vm369, %v366, %v368
        %v375 = vmul.f32 %v312, %v364
        %v376 = vmul.f32 %v314, %v370
        %v377 = vmul.f32 %v316, %v371
        %381 = vrot.lane.b32.xlu0 %v347, 113
        %v382 = vpop.permute.xlu0 %381
        %383 = vrot.lane.b32.xlu0 %v348, 113
        %v384 = vpop.permute.xlu0 %383
        %385 = vrot.lane.b32.xlu0 %v349, 113
        %v386 = vpop.permute.xlu0 %385
        %vm387 = vcmask 924672
        %v388 = vsel %vm387, %v382, %v384
        %v389 = vsel %vm387, %v384, %v386
        %393 = vst [vmem:[#allocation2] sm:$0xff] %v388
        %394 = vst [vmem:[#allocation2 + $0x8] sm:$0xff] %v389
        %vm395 = vcmask 523264
        %396 = vst.msk [vmem:[#allocation2 + $0x10] sm:$0xff] %vm395, %v386
        %400 = vrot.lane.b32.xlu0 %v312, 112
        %v401 = vpop.permute.xlu0 %400
        %402 = vrot.lane.b32.xlu0 %v314, 112
        %v403 = vpop.permute.xlu0 %402
        %404 = vrot.lane.b32.xlu0 %v316, 112
        %v405 = vpop.permute.xlu0 %404
        %vm406 = vcmask 916480
        %v407 = vsel %vm406, %v401, %v403
        %v408 = vsel %vm406, %v403, %v405
        %412 = vst [vmem:[#allocation2 + $0x18] sm:$0xff] %v407
        %413 = vst [vmem:[#allocation2 + $0x20] sm:$0xff] %v408
        %414 = vst.msk [vmem:[#allocation2 + $0x28] sm:$0xff] %vm395, %v405
        %418 = vrot.lane.b32.xlu0 %v375, 111
        %v419 = vpop.permute.xlu0 %418
        %420 = vrot.lane.b32.xlu0 %v376, 111
        %v421 = vpop.permute.xlu0 %420
        %422 = vrot.lane.b32.xlu0 %v377, 111
        %v423 = vpop.permute.xlu0 %422
        %vm424 = vcmask 908288
        %v425 = vsel %vm424, %v419, %v421
        %v426 = vsel %vm424, %v421, %v423
        %430 = vst [vmem:[#allocation2 + $0x30] sm:$0xff] %v425
        %431 = vst [vmem:[#allocation2 + $0x38] sm:$0xff] %v426
        %432 = vst.msk [vmem:[#allocation2 + $0x40] sm:$0xff] %vm395, %v423
        %433 = vrot.lane.b32.xlu0 %v347, 97
        %v434 = vpop.permute.xlu0 %433
        %435 = vrot.lane.b32.xlu0 %v348, 97
        %v436 = vpop.permute.xlu0 %435
        %437 = vrot.lane.b32.xlu0 %v349, 97
        %v438 = vpop.permute.xlu0 %437
        %vm439 = vcmask 793600
        %v440 = vsel %vm439, %v434, %v436
        %v441 = vsel %vm439, %v436, %v438
        %445 = vst [vmem:[#allocation2 + $0x48] sm:$0xff] %v440
        %446 = vst [vmem:[#allocation2 + $0x50] sm:$0xff] %v441
        %447 = vst.msk [vmem:[#allocation2 + $0x58] sm:$0xff] %vm395, %v438
        %448 = vrot.lane.b32.xlu0 %v312, 96
        %v449 = vpop.permute.xlu0 %448
        %450 = vrot.lane.b32.xlu0 %v314, 96
        %v451 = vpop.permute.xlu0 %450
        %452 = vrot.lane.b32.xlu0 %v316, 96
        %v453 = vpop.permute.xlu0 %452
        %vm454 = vcmask 785408
        %v455 = vsel %vm454, %v449, %v451
        %v456 = vsel %vm454, %v451, %v453
        %460 = vst [vmem:[#allocation2 + $0x60] sm:$0xff] %v455
        %461 = vst [vmem:[#allocation2 + $0x68] sm:$0xff] %v456
        %462 = vst.msk [vmem:[#allocation2 + $0x70] sm:$0xff] %vm395, %v453
        %463 = vrot.lane.b32.xlu0 %v375, 95
        %v464 = vpop.permute.xlu0 %463
        %465 = vrot.lane.b32.xlu0 %v376, 95
        %v466 = vpop.permute.xlu0 %465
        %467 = vrot.lane.b32.xlu0 %v377, 95
        %v468 = vpop.permute.xlu0 %467
        %vm469 = vcmask 777216
        %v470 = vsel %vm469, %v464, %v466
        %v471 = vsel %vm469, %v466, %v468
        %475 = vst [vmem:[#allocation2 + $0x78] sm:$0xff] %v470
        %476 = vst [vmem:[#allocation2 + $0x80] sm:$0xff] %v471
        %477 = vst.msk [vmem:[#allocation2 + $0x88] sm:$0xff] %vm395, %v468
        %478 = vrot.lane.b32.xlu0 %v347, 81
        %v479 = vpop.permute.xlu0 %478
        %480 = vrot.lane.b32.xlu0 %v348, 81
        %v481 = vpop.permute.xlu0 %480
        %482 = vrot.lane.b32.xlu0 %v349, 81
        %v483 = vpop.permute.xlu0 %482
        %vm484 = vcmask 662528
        %v485 = vsel %vm484, %v479, %v481
        %v486 = vsel %vm484, %v481, %v483
        %490 = vst [vmem:[#allocation2 + $0x90] sm:$0xff] %v485
        %491 = vst [vmem:[#allocation2 + $0x98] sm:$0xff] %v486
        %492 = vst.msk [vmem:[#allocation2 + $0xa0] sm:$0xff] %vm395, %v483
        %493 = vrot.lane.b32.xlu0 %v312, 80
        %v494 = vpop.permute.xlu0 %493
        %495 = vrot.lane.b32.xlu0 %v314, 80
        %v496 = vpop.permute.xlu0 %495
        %497 = vrot.lane.b32.xlu0 %v316, 80
        %v498 = vpop.permute.xlu0 %497
        %vm499 = vcmask 654336
        %v500 = vsel %vm499, %v494, %v496
        %v501 = vsel %vm499, %v496, %v498
        %505 = vst [vmem:[#allocation2 + $0xa8] sm:$0xff] %v500
        %506 = vst [vmem:[#allocation2 + $0xb0] sm:$0xff] %v501
        %507 = vst.msk [vmem:[#allocation2 + $0xb8] sm:$0xff] %vm395, %v498
        %508 = vrot.lane.b32.xlu0 %v375, 79
        %v509 = vpop.permute.xlu0 %508
        %510 = vrot.lane.b32.xlu0 %v376, 79
        %v511 = vpop.permute.xlu0 %510
        %512 = vrot.lane.b32.xlu0 %v377, 79
        %v513 = vpop.permute.xlu0 %512
        %vm514 = vcmask 646144
        %v515 = vsel %vm514, %v509, %v511
        %v516 = vsel %vm514, %v511, %v513
        %520 = vst [vmem:[#allocation2 + $0xc0] sm:$0xff] %v515
        %521 = vst [vmem:[#allocation2 + $0xc8] sm:$0xff] %v516
        %522 = vst.msk [vmem:[#allocation2 + $0xd0] sm:$0xff] %vm395, %v513
        %v523 = vld [vmem:[%s1] sm:$0xff]
        %v524 = vld [vmem:[#allocation2] sm:$0xff]
        %v525 = vld [vmem:[#allocation2 + $0x8] sm:$0xff]
        %v526 = vld [vmem:[#allocation2 + $0x10] sm:$0xff]
        %v527 = vld [vmem:[#allocation2 + $0x18] sm:$0xff]
        %v528 = vld [vmem:[#allocation2 + $0x20] sm:$0xff]
        %v529 = vld [vmem:[#allocation2 + $0x28] sm:$0xff]
        %v530 = vld [vmem:[#allocation2 + $0x30] sm:$0xff]
        %v531 = vld [vmem:[#allocation2 + $0x38] sm:$0xff]
        %v532 = vld [vmem:[#allocation2 + $0x40] sm:$0xff]
        %v533 = vld [vmem:[#allocation2 + $0x48] sm:$0xff]
        %v534 = vld [vmem:[#allocation2 + $0x50] sm:$0xff]
        %v535 = vld [vmem:[#allocation2 + $0x58] sm:$0xff]
        %v536 = vld [vmem:[#allocation2 + $0x60] sm:$0xff]
        %v537 = vld [vmem:[#allocation2 + $0x68] sm:$0xff]
        %v538 = vld [vmem:[#allocation2 + $0x70] sm:$0xff]
        %v539 = vld [vmem:[#allocation2 + $0x78] sm:$0xff]
        %v540 = vld [vmem:[#allocation2 + $0x80] sm:$0xff]
        %v541 = vld [vmem:[#allocation2 + $0x88] sm:$0xff]
        %v542 = vld [vmem:[#allocation2 + $0x90] sm:$0xff]
        %v543 = vld [vmem:[#allocation2 + $0x98] sm:$0xff]
        %v544 = vld [vmem:[#allocation2 + $0xa0] sm:$0xff]
        %v545 = vld [vmem:[#allocation2 + $0xa8] sm:$0xff]
        %v546 = vld [vmem:[#allocation2 + $0xb0] sm:$0xff]
        %v547 = vld [vmem:[#allocation2 + $0xb8] sm:$0xff]
        %v548 = vld [vmem:[#allocation2 + $0xc0] sm:$0xff]
        %v549 = vld [vmem:[#allocation2 + $0xc8] sm:$0xff]
        %v550 = vld [vmem:[#allocation2 + $0xd0] sm:$0xff]
        %v551 = vld [vmem:[%s2] sm:$0xff]
        %553 = vset.pattern.permute.xlu0 0
        %554 = vperm.xlu0 %553, %v551
        %v555 = vpop.permute.xlu0 %554
        %vm557 = vcmask 588800
        %v559 = vsel %vm557, %v523, 0
        %561 = vmatprep.subr.mxu0 %v525
        %562 = vmatpush1.msra.mxu0 %v524
        %563 = vmatprep.subr.mxu0 %v528
        %564 = vmatpush1.msra.mxu0 %v527
        %565 = vmatprep.subr.mxu0 %v531
        %566 = vmatpush1.msra.mxu0 %v530
        %567 = vmatprep.subr.mxu0 %v534
        %568 = vmatpush1.msra.mxu0 %v533
        %569 = vmatprep.subr.mxu0 %v537
        %570 = vmatpush1.msra.mxu0 %v536
        %571 = vmatprep.subr.mxu0 %v540
        %572 = vmatpush1.msra.mxu0 %v539
        %573 = vmatprep.subr.mxu0 %v543
        %574 = vmatpush1.msra.mxu0 %v542
        %575 = vmatprep.subr.mxu0 %v546
        %576 = vmatpush1.msra.mxu0 %v545
        %577 = vmatprep.subr.mxu0 %v549
        %578 = vmatpush1.msra.mxu0 %v548
        %579 = vmatprep.subr.mxu0 0.0
        %580 = vmatpush1.msra.mxu0 0.0
        %581 = vmatprep.subr.mxu0 0.0
        %582 = vmatpush1.msra.mxu0 0.0
        %583 = vmatprep.subr.mxu0 0.0
        %584 = vmatpush1.msra.mxu0 0.0
        %585 = vmatprep.subr.mxu0 0.0
        %586 = vmatpush1.msra.mxu0 0.0
        %587 = vmatprep.subr.mxu0 0.0
        %588 = vmatpush1.msra.mxu0 0.0
        %589 = vmatprep.subr.mxu0 0.0
        %590 = vmatpush1.msra.mxu0 0.0
        %591 = vmatprep.subr.mxu0 0.0
        %592 = vmatpush1.msra.mxu0 0.0
        %593 = vmatprep.subr.mxu0 0.0
        %594 = vmatpush1.msra.mxu0 0.0
        %595 = vmatprep.subr.mxu0 0.0
        %596 = vmatpush1.msra.mxu0 0.0
        %597 = vmatprep.subr.mxu0 0.0
        %598 = vmatpush1.msra.mxu0 0.0
        %599 = vmatprep.subr.mxu0 0.0
        %600 = vmatpush1.msra.mxu0 0.0
        %601 = vmatprep.subr.mxu0 0.0
        %602 = vmatpush1.msra.mxu0 0.0
        %603 = vmatprep.subr.mxu0 0.0
        %604 = vmatpush1.msra.mxu0 0.0
        %605 = vmatprep.subr.mxu0 0.0
        %606 = vmatpush1.msra.mxu0 0.0
        %607 = vmatprep.subr.mxu0 0.0
        %608 = vmatpush1.msra.mxu0 0.0
        %609 = vmatprep.subr.mxu0 0.0
        %610 = vmatpush1.msra.mxu0 0.0
        %611 = vmatprep.subr.mxu0 0.0
        %612 = vmatpush1.msra.mxu0 0.0
        %613 = vmatprep.subr.mxu0 0.0
        %614 = vmatpush1.msra.mxu0 0.0
        %615 = vmatprep.subr.mxu0 0.0
        %616 = vmatpush1.msra.mxu0 0.0
        %617 = vmatprep.subr.mxu0 0.0
        %618 = vmatpush1.msra.mxu0 0.0
        %619 = vmatprep.subr.mxu0 0.0
        %620 = vmatpush1.msra.mxu0 0.0
        %621 = vmatprep.subr.mxu0 0.0
        %622 = vmatpush1.msra.mxu0 0.0
        %623 = vmatprep.subr.mxu0 0.0
        %624 = vmatpush1.msra.mxu0 0.0
        %625 = vmatprep.mubr.f32.mxu0 0.0
        %626 = vmatmul.mubr.f32.gmra.mrb[0].mxu0 %v559
        %v627 = vpop.f32.mrb[0].mxu0
        %v628 = vadd.f32 %v555, %v627
        %v629 = vpop.f32.mrb[0].mxu0
        %v630 = vadd.f32 %v555, %v629
        %631 = vdwg.mxu0
        %632 = vmatprep.subr.mxu0 0.0
        %633 = vmatpush1.msra.mxu0 %v526
        %634 = vmatprep.subr.mxu0 0.0
        %635 = vmatpush1.msra.mxu0 %v529
        %636 = vmatprep.subr.mxu0 0.0
        %637 = vmatpush1.msra.mxu0 %v532
        %638 = vmatprep.subr.mxu0 0.0
        %639 = vmatpush1.msra.mxu0 %v535
        %640 = vmatprep.subr.mxu0 0.0
        %641 = vmatpush1.msra.mxu0 %v538
        %642 = vmatprep.subr.mxu0 0.0
        %643 = vmatpush1.msra.mxu0 %v541
        %644 = vmatprep.subr.mxu0 0.0
        %645 = vmatpush1.msra.mxu0 %v544
        %646 = vmatprep.subr.mxu0 0.0
        %647 = vmatpush1.msra.mxu0 %v547
        %648 = vmatprep.subr.mxu0 0.0
        %649 = vmatpush1.msra.mxu0 %v550
        %650 = vmatprep.subr.mxu0 0.0
        %651 = vmatpush1.msra.mxu0 0.0
        %652 = vmatprep.subr.mxu0 0.0
        %653 = vmatpush1.msra.mxu0 0.0
        %654 = vmatprep.subr.mxu0 0.0
        %655 = vmatpush1.msra.mxu0 0.0
        %656 = vmatprep.subr.mxu0 0.0
        %657 = vmatpush1.msra.mxu0 0.0
        %658 = vmatprep.subr.mxu0 0.0
        %659 = vmatpush1.msra.mxu0 0.0
        %660 = vmatprep.subr.mxu0 0.0
        %661 = vmatpush1.msra.mxu0 0.0
        %662 = vmatprep.subr.mxu0 0.0
        %663 = vmatpush1.msra.mxu0 0.0
        %664 = vmatprep.subr.mxu0 0.0
        %665 = vmatpush1.msra.mxu0 0.0
        %666 = vmatprep.subr.mxu0 0.0
        %667 = vmatpush1.msra.mxu0 0.0
        %668 = vmatprep.subr.mxu0 0.0
        %669 = vmatpush1.msra.mxu0 0.0
        %670 = vmatprep.subr.mxu0 0.0
        %671 = vmatpush1.msra.mxu0 0.0
        %672 = vmatprep.subr.mxu0 0.0
        %673 = vmatpush1.msra.mxu0 0.0
        %674 = vmatprep.subr.mxu0 0.0
        %675 = vmatpush1.msra.mxu0 0.0
        %676 = vmatprep.subr.mxu0 0.0
        %677 = vmatpush1.msra.mxu0 0.0
        %678 = vmatprep.subr.mxu0 0.0
        %679 = vmatpush1.msra.mxu0 0.0
        %680 = vmatprep.subr.mxu0 0.0
        %681 = vmatpush1.msra.mxu0 0.0
        %682 = vmatprep.subr.mxu0 0.0
        %683 = vmatpush1.msra.mxu0 0.0
        %684 = vmatprep.subr.mxu0 0.0
        %685 = vmatpush1.msra.mxu0 0.0
        %686 = vmatprep.subr.mxu0 0.0
        %687 = vmatpush1.msra.mxu0 0.0
        %688 = vmatprep.subr.mxu0 0.0
        %689 = vmatpush1.msra.mxu0 0.0
        %690 = vmatprep.subr.mxu0 0.0
        %691 = vmatpush1.msra.mxu0 0.0
        %692 = vmatprep.subr.mxu0 0.0
        %693 = vmatpush1.msra.mxu0 0.0
        %694 = vmatprep.subr.mxu0 0.0
        %695 = vmatpush1.msra.mxu0 0.0
        %696 = vmatprep.mubr.f32.mxu0 0.0
        %697 = vmatmul.mubr.f32.gmra.mrb[0].mxu0 %v559
        %v698 = vpop.f32.mrb[0].mxu0
        %v699 = vadd.f32 %v555, %v698
        %v700 = vpop.f32.mrb[0].mxu0
        %701 = vdwg.mxu0
        %v702 = vmax.f32 %v628, 0.0
        %v703 = vmax.f32 %v630, 0.0
        %v704 = vmax.f32 %v699, 0.0
        %v705 = vlaneseq
        %v706 = vand.u32 %v705, 127
        %v707 = vadd.s32 %v706, 128
        %v708 = vadd.s32 %v706, 256
        %p709 = scmp.eq.s32.totalorder %s29, 0
        %vm710 = vcmp.ge.s32.totalorder %v706, 16
        %vm711 = vcmp.ge.s32.totalorder %v707, 16
        %vm712 = vcmp.ge.s32.totalorder %v708, 16
        %vm713 = vcmp.lt.s32.totalorder %v706, 32
        %vm714 = vcmp.lt.s32.totalorder %v707, 32
        %vm715 = vcmp.lt.s32.totalorder %v708, 32
        %vm716 = vmand %vm710, %vm713
        %vm717 = vmand %vm711, %vm714
        %vm718 = vmand %vm712, %vm715
        %s719 = scalar_select %p709, 1, 0
        %v720 = vstv %s719
        %vm721 = vcmp.eq.s32.totalorder %v720, 1
        %vm722 = vmand %vm721, %vm716
        %vm723 = vmand %vm721, %vm717
        %vm724 = vmand %vm721, %vm718
        %vm725 = vcmp.ge.s32.totalorder %v706, 288
        %vm726 = vcmp.ge.s32.totalorder %v707, 288
        %vm727 = vcmp.ge.s32.totalorder %v708, 288
        %vm728 = vcmp.lt.s32.totalorder %v706, 304
        %vm729 = vcmp.lt.s32.totalorder %v707, 304
        %vm730 = vcmp.lt.s32.totalorder %v708, 304
        %vm731 = vmand %vm725, %vm728
        %vm732 = vmand %vm726, %vm729
        %vm733 = vmand %vm727, %vm730
        %vm734 = vmand %vm721, %vm731
        %vm735 = vmand %vm721, %vm732
        %vm736 = vmand %vm721, %vm733
        %vm737 = vmor %vm722, %vm734
        %vm738 = vmor %vm723, %vm735
        %vm739 = vmor %vm724, %vm736
        %v740 = vsel %vm737, 1, 0
        %v741 = vsel %vm738, 1, 0
        %v742 = vsel %vm739, 1, 0
        %vm743 = vcmp.eq.s32.totalorder %v740, 1
        %vm744 = vcmp.eq.s32.totalorder %v741, 1
        %vm745 = vcmp.eq.s32.totalorder %v742, 1
        %v746 = vsel %vm743, 0.0, %v702
        %v747 = vsel %vm744, 0.0, %v703
        %v748 = vsel %vm745, 0.0, %v704
        %v749 = vmul.f32 %v746, %v336
        %v750 = vmul.f32 %v747, %v342
        %v751 = vmul.f32 %v748, %v343
        %v752 = vmul.f32 %v746, %v364
        %v753 = vmul.f32 %v747, %v370
        %v754 = vmul.f32 %v748, %v371
        %758 = vrot.lane.b32.xlu0 %v749, 113
        %v759 = vpop.permute.xlu0 %758
        %760 = vrot.lane.b32.xlu0 %v750, 113
        %v761 = vpop.permute.xlu0 %760
        %762 = vrot.lane.b32.xlu0 %v751, 113
        %v763 = vpop.permute.xlu0 %762
        %v764 = vsel %vm387, %v759, %v761
        %v765 = vsel %vm387, %v761, %v763
        %768 = vst [vmem:[#allocation2] sm:$0xff] %v764
        %769 = vst [vmem:[#allocation2 + $0x8] sm:$0xff] %v765
        %773 = vrot.lane.b32.xlu0 %v746, 112
        %v774 = vpop.permute.xlu0 %773
        %775 = vrot.lane.b32.xlu0 %v747, 112
        %v776 = vpop.permute.xlu0 %775
        %777 = vrot.lane.b32.xlu0 %v748, 112
        %v778 = vpop.permute.xlu0 %777
        %v779 = vsel %vm406, %v774, %v776
        %v780 = vsel %vm406, %v776, %v778
        %783 = vst [vmem:[#allocation2 + $0x18] sm:$0xff] %v779
        %784 = vst [vmem:[#allocation2 + $0x20] sm:$0xff] %v780
        %788 = vrot.lane.b32.xlu0 %v752, 111
        %v789 = vpop.permute.xlu0 %788
        %790 = vrot.lane.b32.xlu0 %v753, 111
        %v791 = vpop.permute.xlu0 %790
        %792 = vrot.lane.b32.xlu0 %v754, 111
        %v793 = vpop.permute.xlu0 %792
        %v794 = vsel %vm424, %v789, %v791
        %v795 = vsel %vm424, %v791, %v793
        %798 = vst [vmem:[#allocation2 + $0x30] sm:$0xff] %v794
        %799 = vst [vmem:[#allocation2 + $0x38] sm:$0xff] %v795
        %800 = vrot.lane.b32.xlu0 %v749, 97
        %v801 = vpop.permute.xlu0 %800
        %802 = vrot.lane.b32.xlu0 %v750, 97
        %v803 = vpop.permute.xlu0 %802
        %804 = vrot.lane.b32.xlu0 %v751, 97
        %v805 = vpop.permute.xlu0 %804
        %v806 = vsel %vm439, %v801, %v803
        %v807 = vsel %vm439, %v803, %v805
        %810 = vst [vmem:[#allocation2 + $0x48] sm:$0xff] %v806
        %811 = vst [vmem:[#allocation2 + $0x50] sm:$0xff] %v807
        %812 = vrot.lane.b32.xlu0 %v746, 96
        %v813 = vpop.permute.xlu0 %812
        %814 = vrot.lane.b32.xlu0 %v747, 96
        %v815 = vpop.permute.xlu0 %814
        %816 = vrot.lane.b32.xlu0 %v748, 96
        %v817 = vpop.permute.xlu0 %816
        %v818 = vsel %vm454, %v813, %v815
        %v819 = vsel %vm454, %v815, %v817
        %822 = vst [vmem:[#allocation2 + $0x60] sm:$0xff] %v818
        %823 = vst [vmem:[#allocation2 + $0x68] sm:$0xff] %v819
        %824 = vrot.lane.b32.xlu0 %v752, 95
        %v825 = vpop.permute.xlu0 %824
        %826 = vrot.lane.b32.xlu0 %v753, 95
        %v827 = vpop.permute.xlu0 %826
        %828 = vrot.lane.b32.xlu0 %v754, 95
        %v829 = vpop.permute.xlu0 %828
        %v830 = vsel %vm469, %v825, %v827
        %v831 = vsel %vm469, %v827, %v829
        %834 = vst [vmem:[#allocation2 + $0x78] sm:$0xff] %v830
        %835 = vst [vmem:[#allocation2 + $0x80] sm:$0xff] %v831
        %836 = vrot.lane.b32.xlu0 %v749, 81
        %v837 = vpop.permute.xlu0 %836
        %838 = vrot.lane.b32.xlu0 %v750, 81
        %v839 = vpop.permute.xlu0 %838
        %840 = vrot.lane.b32.xlu0 %v751, 81
        %v841 = vpop.permute.xlu0 %840
        %v842 = vsel %vm484, %v837, %v839
        %v843 = vsel %vm484, %v839, %v841
        %846 = vst [vmem:[#allocation2 + $0x90] sm:$0xff] %v842
        %847 = vst [vmem:[#allocation2 + $0x98] sm:$0xff] %v843
        %848 = vrot.lane.b32.xlu0 %v746, 80
        %v849 = vpop.permute.xlu0 %848
        %850 = vrot.lane.b32.xlu0 %v747, 80
        %v851 = vpop.permute.xlu0 %850
        %852 = vrot.lane.b32.xlu0 %v748, 80
        %v853 = vpop.permute.xlu0 %852
        %v854 = vsel %vm499, %v849, %v851
        %v855 = vsel %vm499, %v851, %v853
        %858 = vst [vmem:[#allocation2 + $0xa8] sm:$0xff] %v854
        %859 = vst [vmem:[#allocation2 + $0xb0] sm:$0xff] %v855
        %860 = vrot.lane.b32.xlu0 %v752, 79
        %v861 = vpop.permute.xlu0 %860
        %862 = vrot.lane.b32.xlu0 %v753, 79
        %v863 = vpop.permute.xlu0 %862
        %864 = vrot.lane.b32.xlu0 %v754, 79
        %v865 = vpop.permute.xlu0 %864
        %v866 = vsel %vm514, %v861, %v863
        %v867 = vsel %vm514, %v863, %v865
        %870 = vst [vmem:[#allocation2 + $0xc0] sm:$0xff] %v866
        %871 = vst [vmem:[#allocation2 + $0xc8] sm:$0xff] %v867
        %v872 = vld [vmem:[%s3] sm:$0xff]
        %v873 = vld [vmem:[#allocation2] sm:$0xff]
        %v874 = vld [vmem:[#allocation2 + $0x8] sm:$0xff]
        %v875 = vld [vmem:[#allocation2 + $0x18] sm:$0xff]
        %v876 = vld [vmem:[#allocation2 + $0x20] sm:$0xff]
        %v877 = vld [vmem:[#allocation2 + $0x30] sm:$0xff]
        %v878 = vld [vmem:[#allocation2 + $0x38] sm:$0xff]
        %v879 = vld [vmem:[#allocation2 + $0x48] sm:$0xff]
        %v880 = vld [vmem:[#allocation2 + $0x50] sm:$0xff]
        %v881 = vld [vmem:[#allocation2 + $0x60] sm:$0xff]
        %v882 = vld [vmem:[#allocation2 + $0x68] sm:$0xff]
        %v883 = vld [vmem:[#allocation2 + $0x78] sm:$0xff]
        %v884 = vld [vmem:[#allocation2 + $0x80] sm:$0xff]
        %v885 = vld [vmem:[#allocation2 + $0x90] sm:$0xff]
        %v886 = vld [vmem:[#allocation2 + $0x98] sm:$0xff]
        %v887 = vld [vmem:[#allocation2 + $0xa8] sm:$0xff]
        %v888 = vld [vmem:[#allocation2 + $0xb0] sm:$0xff]
        %v889 = vld [vmem:[#allocation2 + $0xc0] sm:$0xff]
        %v890 = vld [vmem:[#allocation2 + $0xc8] sm:$0xff]
        %v891 = vld [vmem:[%s4] sm:$0xff]
        %893 = vset.pattern.permute.xlu0 0
        %894 = vperm.xlu0 %893, %v891
        %v895 = vpop.permute.xlu0 %894
        %v898 = vsel %vm557, %v872, 0
        %900 = vmatprep.subr.mxu0 %v874
        %901 = vmatpush1.msra.mxu0 %v873
        %902 = vmatprep.subr.mxu0 %v876
        %903 = vmatpush1.msra.mxu0 %v875
        %904 = vmatprep.subr.mxu0 %v878
        %905 = vmatpush1.msra.mxu0 %v877
        %906 = vmatprep.subr.mxu0 %v880
        %907 = vmatpush1.msra.mxu0 %v879
        %908 = vmatprep.subr.mxu0 %v882
        %909 = vmatpush1.msra.mxu0 %v881
        %910 = vmatprep.subr.mxu0 %v884
        %911 = vmatpush1.msra.mxu0 %v883
        %912 = vmatprep.subr.mxu0 %v886
        %913 = vmatpush1.msra.mxu0 %v885
        %914 = vmatprep.subr.mxu0 %v888
        %915 = vmatpush1.msra.mxu0 %v887
        %916 = vmatprep.subr.mxu0 %v890
        %917 = vmatpush1.msra.mxu0 %v889
        %918 = vmatprep.subr.mxu0 0.0
        %919 = vmatpush1.msra.mxu0 0.0
        %920 = vmatprep.subr.mxu0 0.0
        %921 = vmatpush1.msra.mxu0 0.0
        %922 = vmatprep.subr.mxu0 0.0
        %923 = vmatpush1.msra.mxu0 0.0
        %924 = vmatprep.subr.mxu0 0.0
        %925 = vmatpush1.msra.mxu0 0.0
        %926 = vmatprep.subr.mxu0 0.0
        %927 = vmatpush1.msra.mxu0 0.0
        %928 = vmatprep.subr.mxu0 0.0
        %929 = vmatpush1.msra.mxu0 0.0
        %930 = vmatprep.subr.mxu0 0.0
        %931 = vmatpush1.msra.mxu0 0.0
        %932 = vmatprep.subr.mxu0 0.0
        %933 = vmatpush1.msra.mxu0 0.0
        %934 = vmatprep.subr.mxu0 0.0
        %935 = vmatpush1.msra.mxu0 0.0
        %936 = vmatprep.subr.mxu0 0.0
        %937 = vmatpush1.msra.mxu0 0.0
        %938 = vmatprep.subr.mxu0 0.0
        %939 = vmatpush1.msra.mxu0 0.0
        %940 = vmatprep.subr.mxu0 0.0
        %941 = vmatpush1.msra.mxu0 0.0
        %942 = vmatprep.subr.mxu0 0.0
        %943 = vmatpush1.msra.mxu0 0.0
        %944 = vmatprep.subr.mxu0 0.0
        %945 = vmatpush1.msra.mxu0 0.0
        %946 = vmatprep.subr.mxu0 0.0
        %947 = vmatpush1.msra.mxu0 0.0
        %948 = vmatprep.subr.mxu0 0.0
        %949 = vmatpush1.msra.mxu0 0.0
        %950 = vmatprep.subr.mxu0 0.0
        %951 = vmatpush1.msra.mxu0 0.0
        %952 = vmatprep.subr.mxu0 0.0
        %953 = vmatpush1.msra.mxu0 0.0
        %954 = vmatprep.subr.mxu0 0.0
        %955 = vmatpush1.msra.mxu0 0.0
        %956 = vmatprep.subr.mxu0 0.0
        %957 = vmatpush1.msra.mxu0 0.0
        %958 = vmatprep.subr.mxu0 0.0
        %959 = vmatpush1.msra.mxu0 0.0
        %960 = vmatprep.subr.mxu0 0.0
        %961 = vmatpush1.msra.mxu0 0.0
        %962 = vmatprep.subr.mxu0 0.0
        %963 = vmatpush1.msra.mxu0 0.0
        %964 = vmatprep.mubr.f32.mxu0 0.0
        %965 = vmatmul.mubr.f32.gmra.mrb[0].mxu0 %v898
        %v966 = vpop.f32.mrb[0].mxu0
        %v967 = vadd.f32 %v895, %v966
        %v968 = vpop.f32.mrb[0].mxu0
        %v969 = vadd.f32 %v895, %v968
        %970 = vdwg.mxu0
        %971 = vrot.lane.b32.xlu0 %v312, 64
        %v972 = vpop.permute.xlu0 %971
        %973 = vrot.lane.b32.xlu0 %v314, 64
        %v974 = vpop.permute.xlu0 %973
        %975 = vrot.lane.b32.xlu0 %v316, 64
        %v976 = vpop.permute.xlu0 %975
        %v977 = vsel %vm395, %v972, %v974
        %v978 = vsel %vm395, %v974, %v976
        %v981 = vadd.f32 %v967, %v977
        %v982 = vadd.f32 %v969, %v978
        %v983 = vmax.f32 %v981, 0.0
        %v984 = vmax.f32 %v982, 0.0
        %v987 = vcombine.low %v983, %v984
        %989 = vst [vmem:[%s310] sm:$0xff] %v987
        %s990 = sand.u32 %s198, 1
        %s991 = scalar_lea.sflag [#allocation5], %s990
        %s992 = sand.u32 %s198, 1
        %s993 = smul.addr %s992, 8
        %s994 = scalar_lea.vmem [#allocation6], %s993
        // Predicated region
        $region53: #{tpu_custom_call.1} parent=47 // pred_check
          %p995 = pneg %p208
        $region54: #{tpu_custom_call.1} parent=47 // pred_check_branch
          %997 = sbr.rel (%p995) target = $region56
        $region55: #{tpu_custom_call.1} parent=47 // pred_region
          %s998 = smul.u32 2, %s29
          %s1000 = ssub.s32 128, 128
          %1001 = vsyncadd %s991, %s1000
          %s1002 = smul.addr %s28, 2
          %s1003 = sadd.s32 %s998, %s1002
          %s1004 = smul.addr %s1003, 64
          %s1005 = scalar_lea.hbm %s7, %s1004
          %s1007 = sshll.u32 %s994, 4
          %s1008 = int_to_ptr.vmem [resolvable:$true] %s1007
          %1010 = dma.vmem_to_hbm [thread:$0]  %s1008, 128, %s1005, %s991
        $region56: #{tpu_custom_call.1} parent=47 // pred_fallthru
          _
      $region48: #{tpu_custom_call.1} parent=5 // pred_fallthru
        _
      %p1011 = scmp.le.s32.totalorder 2, %s19
      // Predicated region
      $region57: #{tpu_custom_call.1} parent=5 // pred_check
        %p1012 = pneg %p1011
      $region58: #{tpu_custom_call.1} parent=5 // pred_check_branch
        %1014 = sbr.rel (%p1012) target = $region60
      $region59: #{tpu_custom_call.1} parent=5 // pred_region
        %s1015 = ssub.s32 %s19, 2
        // Predicated region
        $region61: #{tpu_custom_call.1} parent=59 // pred_check
          %p1016 = pneg %p214
        $region62: #{tpu_custom_call.1} parent=59 // pred_check_branch
          %1018 = sbr.rel (%p1016) target = $region64
        $region63: #{tpu_custom_call.1} parent=59 // pred_region
          %s1019 = sand.u32 %s199, 1
          %s1020 = scalar_lea.sflag [#allocation5], %s1019
          %s1021 = sand.u32 %s199, 1
          %s1022 = smul.addr %s1021, 8
          %s1023 = scalar_lea.vmem [#allocation6], %s1022
          %1024 = dma.done %s1020, 128
        $region64: #{tpu_custom_call.1} parent=59 // pred_fallthru
          _
      $region60: #{tpu_custom_call.1} parent=5 // pred_fallthru
        _
    $region6: #{tpu_custom_call.1} parent=1 // loop_footer
      %s23 = sadd.s32 1, %s19
    $region7: #{tpu_custom_call.1} parent=1 // loop_footer_branch
      %18 = sbr.rel target = $region3
    $region8: #{tpu_custom_call.1} parent=1 // loop_exit
      _
    %1025 = vsyncpa [#allocation4], 1
    %s1026 = scalar_lea.sflag [#allocation4], 1
    %1027 = vsyncpa %s1026, 1
    %1028 = vsyncpa [#allocation5], 1
    %s1029 = scalar_lea.sflag [#allocation5], 1
    %1030 = vsyncpa %s1029, 1

</llo_original>
